<compile_context>
chip_gen: v5e
topology: v5e:2x2
jax: 0.10.0
libtpu: 0.0.40
codegen_flags: <defaults>
</compile_context>

<pallas_src>
import jax
import jax.numpy as jnp
from jax.experimental import pallas as pl
from jax.experimental.pallas import tpu as pltpu


def _avg_pool_2x2_kernel(x_ref, qh_ref, pw_ref, o_ref):
    # x_ref : (1, 2*TH, W)   input rows feeding TH output rows of one N*C slab
    # qh_ref: (TH, 2*TH)     0/1 row-pair-sum matrix
    # pw_ref: (W, Wo)        0/1 col-pair-sum matrix
    # o_ref : (1, TH, Wo)
    x = x_ref[0].astype(jnp.float32)                                    # (2TH, W)
    s = jnp.dot(qh_ref[...], x, preferred_element_type=jnp.float32)     # (TH, W)
    p = jnp.dot(s, pw_ref[...], preferred_element_type=jnp.float32)     # (TH, Wo)
    o_ref[0] = (p * 0.25).astype(o_ref.dtype)


def _pick_tile_h(ho, w, itemsize, budget_bytes=2 << 20, th_cap=256):
    # TH must divide Ho and give legal sublane blocks (TH % 8 == 0, or the
    # full extent).  Prefer the largest tile whose input block fits `budget`
    # (keeps double-buffered VMEM bounded while blocks stay >= ~MiB-scale).
    valid = [t for t in range(1, ho + 1)
             if ho % t == 0 and (t % 8 == 0 or t == ho)]
    good = [t for t in valid
            if t <= th_cap and 2 * t * w * itemsize <= budget_bytes]
    return max(good) if good else min(valid)


def downsample(x_nchw, with_conv=False):
    # `with_conv` matches the PyTorch module's signature; that module's
    # __init__ ignores it and forward() always applies avg_pool2d(2, 2).
    n, c, h, w = x_nchw.shape
    ho, wo = h // 2, w // 2
    # torch avg_pool2d(k=2, s=2) floors the output size: drop odd tails.
    x_nchw = x_nchw[:, :, : 2 * ho, : 2 * wo]
    h, w = 2 * ho, 2 * wo
    dtype = x_nchw.dtype

    x2 = x_nchw.reshape(n * c, h, w)            # free reshape, stays NCHW order

    th = _pick_tile_h(ho, w, jnp.dtype(dtype).itemsize)

    # 0/1 pair-sum matrices in f32 so the 2x2 accumulate is exact in f32.
    qh = (jnp.arange(2 * th, dtype=jnp.int32)[None, :] // 2
          == jnp.arange(th, dtype=jnp.int32)[:, None]).astype(jnp.float32)
    pw = (jnp.arange(w, dtype=jnp.int32)[:, None] // 2
          == jnp.arange(wo, dtype=jnp.int32)[None, :]).astype(jnp.float32)

    out2 = pl.pallas_call(
        _avg_pool_2x2_kernel,
        out_shape=jax.ShapeDtypeStruct((n * c, ho, wo), dtype),
        grid=(n * c, ho // th),
        in_specs=[
            pl.BlockSpec((1, 2 * th, w), lambda i, j: (i, j, 0)),
            pl.BlockSpec((th, 2 * th), lambda i, j: (0, 0)),   # resident
            pl.BlockSpec((w, wo), lambda i, j: (0, 0)),        # resident
        ],
        out_specs=pl.BlockSpec((1, th, wo), lambda i, j: (i, j, 0)),
        compiler_params=pltpu.CompilerParams(
            dimension_semantics=("parallel", "parallel"),
        ),
    )(x2, qh, pw)

    return out2.reshape(n, c, ho, wo)           # free reshape back to NCHW


if __name__ == "__main__":
    key = jax.random.PRNGKey(0)
    x = jax.random.normal(key, (2, 4, 16, 16), dtype=jnp.float32)  # NCHW

    out = downsample(x)
    out = jax.block_until_ready(out)

    # Reference: avg_pool2d(kernel=2, stride=2) in plain JAX (NCHW).
    n, c, h, w = x.shape
    ref = jnp.mean(x.reshape(n, c, h // 2, 2, w // 2, 2), axis=(3, 5))

    assert out.shape == (n, c, h // 2, w // 2), out.shape
    assert out.dtype == x.dtype, out.dtype
    assert jnp.allclose(out, ref, atol=1e-5, rtol=1e-5), "mismatch vs reference"

    print("KERNEL_OK")
</pallas_src>

<mosaic_0001>
module attributes {stable_mosaic.version = 11 : i64} {
  func.func @_avg_pool_2x2_kernel(%arg0: i32, %arg1: i32, %arg2: memref<1x16x16xf32, #tpu.memory_space<vmem>>, %arg3: memref<8x16xf32, #tpu.memory_space<vmem>>, %arg4: memref<16x8xf32, #tpu.memory_space<vmem>>, %arg5: memref<1x8x8xf32, #tpu.memory_space<vmem>>) attributes {dimension_semantics = [#tpu.dimension_semantics<parallel>, #tpu.dimension_semantics<parallel>], iteration_bounds = array<i64: 8, 1>, scalar_prefetch = 0 : i64, scratch_operands = 0 : i64, tpu.core_type = #tpu.core_type<tc>, window_params = [{transform_indices = @transform_0, window_bounds = array<i64: 1, 16, 16>}, {pipeline_mode = #tpu.pipeline_mode<synchronous>, transform_indices = @transform_1, window_bounds = array<i64: 8, 16>}, {pipeline_mode = #tpu.pipeline_mode<synchronous>, transform_indices = @transform_2, window_bounds = array<i64: 16, 8>}, {transform_indices = @transform_3, window_bounds = array<i64: 1, 8, 8>}]} {
    %c0 = arith.constant 0 : index
    %c0_0 = arith.constant 0 : index
    %c0_1 = arith.constant 0 : index
    %0 = vector.load %arg2[%c0, %c0_0, %c0_1] : memref<1x16x16xf32, #tpu.memory_space<vmem>>, vector<1x16x16xf32>
    %1 = vector.shape_cast %0 : vector<1x16x16xf32> to vector<16x16xf32>
    %c0_2 = arith.constant 0 : index
    %c0_3 = arith.constant 0 : index
    %2 = vector.load %arg3[%c0_2, %c0_3] : memref<8x16xf32, #tpu.memory_space<vmem>>, vector<8x16xf32>
    %cst = arith.constant dense<0.000000e+00> : vector<8x16xf32>
    %3 = tpu.matmul %2, %1, %cst {dimension_numbers = #tpu.dot_dimension_numbers<[1], [0], [0], [1], [0, 0, 1, 1], [], []>} : vector<8x16xf32>, vector<16x16xf32>, vector<8x16xf32> -> vector<8x16xf32>
    %c0_4 = arith.constant 0 : index
    %c0_5 = arith.constant 0 : index
    %4 = vector.load %arg4[%c0_4, %c0_5] : memref<16x8xf32, #tpu.memory_space<vmem>>, vector<16x8xf32>
    %cst_6 = arith.constant dense<0.000000e+00> : vector<8x8xf32>
    %5 = tpu.matmul %3, %4, %cst_6 {dimension_numbers = #tpu.dot_dimension_numbers<[1], [0], [0], [1], [0, 0, 1, 1], [], []>} : vector<8x16xf32>, vector<16x8xf32>, vector<8x8xf32> -> vector<8x8xf32>
    %cst_7 = arith.constant 2.500000e-01 : f32
    %6 = vector.broadcast %cst_7 : f32 to vector<8x8xf32>
    %7 = arith.mulf %5, %6 : vector<8x8xf32>
    %c0_8 = arith.constant 0 : index
    %c0_9 = arith.constant 0 : index
    %c0_10 = arith.constant 0 : index
    %8 = vector.load %arg5[%c0_8, %c0_9, %c0_10] : memref<1x8x8xf32, #tpu.memory_space<vmem>>, vector<1x8x8xf32>
    %9 = vector.shape_cast %8 : vector<1x8x8xf32> to vector<8x8xf32>
    %10 = vector.shape_cast %7 : vector<8x8xf32> to vector<1x8x8xf32>
    tpu.vector_store %arg5[%c0_8, %c0_9, %c0_10], %10 {strides = array<i32>} : memref<1x8x8xf32, #tpu.memory_space<vmem>>, vector<1x8x8xf32>,
    return
  }
  func.func @transform_0(%arg0: i32, %arg1: i32) -> (i32, i32, i32) {
    %c0_i32 = arith.constant 0 : i32
    %c0_i32_0 = arith.constant 0 : i32
    return %arg0, %arg1, %c0_i32 : i32, i32, i32
  }
  func.func @transform_1(%arg0: i32, %arg1: i32) -> (i32, i32) {
    %c0_i32 = arith.constant 0 : i32
    %c0_i32_0 = arith.constant 0 : i32
    %c0_i32_1 = arith.constant 0 : i32
    return %c0_i32, %c0_i32_0 : i32, i32
  }
  func.func @transform_2(%arg0: i32, %arg1: i32) -> (i32, i32) {
    %c0_i32 = arith.constant 0 : i32
    %c0_i32_0 = arith.constant 0 : i32
    %c0_i32_1 = arith.constant 0 : i32
    return %c0_i32, %c0_i32_0 : i32, i32
  }
  func.func @transform_3(%arg0: i32, %arg1: i32) -> (i32, i32, i32) {
    %c0_i32 = arith.constant 0 : i32
    %c0_i32_0 = arith.constant 0 : i32
    return %arg0, %arg1, %c0_i32 : i32, i32, i32
  }
}

</mosaic_0001>

<llo_original>
// kernel: tpu_custom_call.1
$region0: #{tpu_custom_call.1}
  #allocation0 [shape = 'u32[]', space=smem, size = 0x4, offset = 0x4, fixed_abs, tag = 'smem constant byte address 0x4 - core index']
  #allocation1 [shape = 'u32[72,128]{1,0:T(1,128)}', space=vmem, size = 0x9000, scoped, tag = 'internal scratch']
  %s0 = inlined_call_operand.hbm [shape: f32[8,16,16], index: 0, kind: input, shape index: {}]
  %s1 = inlined_call_operand.vmem [shape: f32[8,16], index: 1, kind: input, shape index: {}]
  %s2 = inlined_call_operand.vmem [shape: f32[16,8], index: 2, kind: input, shape index: {}]
  %s3 = inlined_call_operand.hbm [shape: f32[8,8,8], index: 3, kind: output, shape index: {}]
  %s4 = sld [smem:[#allocation0]]
  $region49: #{tpu_custom_call.1} parent=0
    _
  %s6 = ssub.s32 1, %s4
  %s7 = scalar_select 0, %s6, %s4
  $region1: #{tpu_custom_call.1} parent=0
    #allocation2 [shape = 'u8[16384]{0}', space=vmem, size = 0x4000, scoped, tag = 'input window, operand 0']
    #allocation3 [shape = 's32[2]{0}', space=sflag, size = 0x8, scoped, tag = 'scoped memory for tpu_custom_call.1']
    #allocation4 [shape = 's32[2]{0}', space=sflag, size = 0x8, scoped, tag = 'scoped memory for tpu_custom_call.1']
    #allocation5 [shape = 'u8[8192]{0}', space=vmem, size = 0x2000, scoped, tag = 'output window, operand 0']
    %8 = vsyncpa [#allocation3], 0
    %s9 = scalar_lea.sflag [#allocation3], 1
    %10 = vsyncpa %s9, 0
    %11 = vsyncpa [#allocation4], 0
    %s12 = scalar_lea.sflag [#allocation4], 1
    %13 = vsyncpa %s12, 0
    loop: start=0, step=1, limit=10
    $region2: #{tpu_custom_call.1} parent=1 // loop_pre_header
      _
    $region3: #{tpu_custom_call.1} parent=1 // loop_header
      %s15 = sphi 0, %s19
      %p16 = scmp.ge.s32.totalorder %s15, 10
      %s22 = sphi 0, %s34
      %s23 = sphi 0, %s30
      %s24 = sphi 0, %s22
      %s25 = sphi 0, %s23
      %s26 = sphi 0, %s24
      %s27 = sphi 0, %s25
      %s39 = sphi 0, %s41
      %s42 = sphi 0, %s39
      %s43 = sphi 0, %s42
      %s59 = sphi 0, %s43
      %s63 = sphi 0, %s63
      %s65 = sphi 0, %s63
      %s66 = sphi 0, %s65
      %s80 = sphi 0, %s66
      %s84 = sphi 0, %s84
      %s86 = sphi 0, %s84
      %s87 = sphi 0, %s86
      %s101 = sphi 0, %s87
      %s109 = sphi 0, %s111
      %s112 = sphi 0, %s109
      %s113 = sphi 0, %s112
      %s129 = sphi 0, %s113
    $region4: #{tpu_custom_call.1} parent=1 // loop_header_branch
      %18 = sbr.rel (%p16) target = $region8
    $region5: #{tpu_custom_call.1} parent=1 // loop_body
      %s20 = ssub.s32 %s15, 1
      %s21 = ssub.s32 %s15, 2
      %s28 = sadd.s32 1, %s23
      %p29 = scmp.ge.s32.totalorder %s28, 1
      %s30 = scalar_select %p29, 0, %s28
      %s31 = sadd.s32 1, %s22
      %s32 = scalar_select %p29, %s31, %s22
      %p33 = scmp.ge.s32.totalorder %s32, 8
      %s34 = scalar_select %p33, 0, %s32
      %s35 = ssub.s32 %s22, %s34
      %s36 = ssub.s32 %s23, %s30
      %s37 = sor.u32 %s35, %s36
      %p38 = scmp.eq.s32.totalorder %s37, 0
      %s40 = sadd.s32 %s39, 1
      %s41 = scalar_select %p38, %s39, %s40
      %p44 = pneg %p38
      %p45 = scmp.eq.s32.totalorder %s15, 7
      %p46 = por %p44, %p45
      %p47 = scmp.ne.s32.totalorder %s39, %s42
      %p48 = scmp.eq.s32.totalorder %s15, 0
      %p49 = por %p47, %p48
      %p50 = scmp.ne.s32.totalorder %s39, %s42
      %p51 = scmp.eq.s32.totalorder %s20, 7
      %p52 = por %p50, %p51
      %p53 = scmp.ne.s32.totalorder %s42, %s43
      %p54 = scmp.eq.s32.totalorder %s20, 0
      %p55 = por %p53, %p54
      %p56 = scmp.ne.s32.totalorder %s42, %s43
      %p57 = scmp.eq.s32.totalorder %s21, 7
      %p58 = por %p56, %p57
      %p60 = scmp.ne.s32.totalorder %s43, %s59
      %p61 = scmp.eq.s32.totalorder %s21, 0
      %p62 = por %p60, %p61
      %s64 = sadd.s32 %s63, 1
      %p67 = scmp.eq.s32.totalorder %s15, 7
      %p68 = scmp.ne.s32.totalorder %s63, %s65
      %p69 = scmp.eq.s32.totalorder %s15, 0
      %p70 = por %p68, %p69
      %p71 = scmp.ne.s32.totalorder %s63, %s65
      %p72 = scmp.eq.s32.totalorder %s20, 7
      %p73 = por %p71, %p72
      %p74 = scmp.ne.s32.totalorder %s65, %s66
      %p75 = scmp.eq.s32.totalorder %s20, 0
      %p76 = por %p74, %p75
      %p77 = scmp.ne.s32.totalorder %s65, %s66
      %p78 = scmp.eq.s32.totalorder %s21, 7
      %p79 = por %p77, %p78
      %p81 = scmp.ne.s32.totalorder %s66, %s80
      %p82 = scmp.eq.s32.totalorder %s21, 0
      %p83 = por %p81, %p82
      %s85 = sadd.s32 %s84, 1
      %p88 = scmp.eq.s32.totalorder %s15, 7
      %p89 = scmp.ne.s32.totalorder %s84, %s86
      %p90 = scmp.eq.s32.totalorder %s15, 0
      %p91 = por %p89, %p90
      %p92 = scmp.ne.s32.totalorder %s84, %s86
      %p93 = scmp.eq.s32.totalorder %s20, 7
      %p94 = por %p92, %p93
      %p95 = scmp.ne.s32.totalorder %s86, %s87
      %p96 = scmp.eq.s32.totalorder %s20, 0
      %p97 = por %p95, %p96
      %p98 = scmp.ne.s32.totalorder %s86, %s87
      %p99 = scmp.eq.s32.totalorder %s21, 7
      %p100 = por %p98, %p99
      %p102 = scmp.ne.s32.totalorder %s87, %s101
      %p103 = scmp.eq.s32.totalorder %s21, 0
      %p104 = por %p102, %p103
      %s105 = ssub.s32 %s22, %s34
      %s106 = ssub.s32 %s23, %s30
      %s107 = sor.u32 %s105, %s106
      %p108 = scmp.eq.s32.totalorder %s107, 0
      %s110 = sadd.s32 %s109, 1
      %s111 = scalar_select %p108, %s109, %s110
      %p114 = pneg %p108
      %p115 = scmp.eq.s32.totalorder %s15, 7
      %p116 = por %p114, %p115
      %p117 = scmp.ne.s32.totalorder %s109, %s112
      %p118 = scmp.eq.s32.totalorder %s15, 0
      %p119 = por %p117, %p118
      %p120 = scmp.ne.s32.totalorder %s109, %s112
      %p121 = scmp.eq.s32.totalorder %s20, 7
      %p122 = por %p120, %p121
      %p123 = scmp.ne.s32.totalorder %s112, %s113
      %p124 = scmp.eq.s32.totalorder %s20, 0
      %p125 = por %p123, %p124
      %p126 = scmp.ne.s32.totalorder %s112, %s113
      %p127 = scmp.eq.s32.totalorder %s21, 7
      %p128 = por %p126, %p127
      %p130 = scmp.ne.s32.totalorder %s113, %s129
      %p131 = scmp.eq.s32.totalorder %s21, 0
      %p132 = por %p130, %p131
      %p133 = scmp.le.s32.totalorder 1, %s15
      %p134 = scmp.lt.s32.totalorder %s15, 9
      %p135 = pnand %p133, %p134
      %p136 = pneg %p135
      // Predicated region
      $region9: #{tpu_custom_call.1} parent=5 // pred_check
        _
      $region10: #{tpu_custom_call.1} parent=5 // pred_check_branch
        %138 = sbr.rel (%p135) target = $region12
      $region11: #{tpu_custom_call.1} parent=5 // pred_region
        %s139 = ssub.s32 %s15, 1
        // Predicated region
        $region13: #{tpu_custom_call.1} parent=11 // pred_check
          %p140 = pneg %p76
        $region14: #{tpu_custom_call.1} parent=11 // pred_check_branch
          %142 = sbr.rel (%p140) target = $region16
        $region15: #{tpu_custom_call.1} parent=11 // pred_region
          _
        $region16: #{tpu_custom_call.1} parent=11 // pred_fallthru
          _
        // Predicated region
        $region17: #{tpu_custom_call.1} parent=11 // pred_check
          %p143 = pneg %p97
        $region18: #{tpu_custom_call.1} parent=11 // pred_check_branch
          %145 = sbr.rel (%p143) target = $region20
        $region19: #{tpu_custom_call.1} parent=11 // pred_region
          _
        $region20: #{tpu_custom_call.1} parent=11 // pred_fallthru
          _
      $region12: #{tpu_custom_call.1} parent=5 // pred_fallthru
        _
      %p146 = scmp.lt.s32.totalorder %s15, 8
      // Predicated region
      $region21: #{tpu_custom_call.1} parent=5 // pred_check
        %p147 = pneg %p146
      $region22: #{tpu_custom_call.1} parent=5 // pred_check_branch
        %149 = sbr.rel (%p147) target = $region24
      $region23: #{tpu_custom_call.1} parent=5 // pred_region
        // Predicated region
        $region25: #{tpu_custom_call.1} parent=23 // pred_check
          %p150 = pneg %p49
        $region26: #{tpu_custom_call.1} parent=23 // pred_check_branch
          %152 = sbr.rel (%p150) target = $region28
        $region27: #{tpu_custom_call.1} parent=23 // pred_region
          %s153 = sand.u32 %s39, 1
          %s154 = scalar_lea.sflag [#allocation3], %s153
          %s155 = sand.u32 %s39, 1
          %s156 = smul.addr %s155, 16
          %s157 = scalar_lea.vmem [#allocation2], %s156
          %s158 = smul.u32 2, %s23
          %160 = vsyncadd %s154, 0
          %s161 = smul.addr %s22, 2
          %s162 = sadd.s32 %s158, %s161
          %s163 = smul.addr %s162, 8
          %s164 = scalar_lea.hbm %s0, %s163
          %s165 = sshll.u32 %s164, 4
          %s166 = int_to_ptr.hbm [resolvable:$true] %s165
          %s167 = sshll.u32 %s157, 4
          %s168 = int_to_ptr.vmem [resolvable:$true] %s167
          %173 = dma.hbm_to_vmem [thread:$0]  %s166, 256, %s168, %s154, 128, 128, 8
        $region28: #{tpu_custom_call.1} parent=23 // pred_fallthru
          _
      $region24: #{tpu_custom_call.1} parent=5 // pred_fallthru
        _
      %p174 = scmp.le.s32.totalorder 1, %s15
      %p175 = scmp.lt.s32.totalorder %s15, 9
      %p176 = pnand %p174, %p175
      %p177 = pneg %p176
      // Predicated region
      $region29: #{tpu_custom_call.1} parent=5 // pred_check
        _
      $region30: #{tpu_custom_call.1} parent=5 // pred_check_branch
        %179 = sbr.rel (%p176) target = $region32
      $region31: #{tpu_custom_call.1} parent=5 // pred_region
        %s180 = ssub.s32 %s15, 1
        %s181 = sand.u32 %s42, 1
        %s182 = scalar_lea.sflag [#allocation3], %s181
        %s183 = sand.u32 %s42, 1
        %s184 = smul.addr %s183, 16
        %s185 = scalar_lea.vmem [#allocation2], %s184
        // Predicated region
        $region33: #{tpu_custom_call.1} parent=31 // pred_check
          %p186 = pneg %p55
        $region34: #{tpu_custom_call.1} parent=31 // pred_check_branch
          %188 = sbr.rel (%p186) target = $region36
        $region35: #{tpu_custom_call.1} parent=31 // pred_region
          %190 = dma.done %s182, 256
        $region36: #{tpu_custom_call.1} parent=31 // pred_fallthru
          _
        %s191 = sand.u32 %s42, 1
        %s192 = scalar_lea.sflag [#allocation3], %s191
        %s193 = sand.u32 %s42, 1
        %s194 = smul.addr %s193, 16
        %s195 = scalar_lea.vmem [#allocation2], %s194
        %p196 = pneg %p55
        %p197 = pneg %p52
        %p198 = pneg %p76
        %p199 = pneg %p73
        %p200 = pneg %p97
        %p201 = pneg %p94
        %p202 = pneg %p125
        %p203 = pneg %p122
        %s204 = sand.u32 %s112, 1
        %s205 = scalar_lea.sflag [#allocation4], %s204
        %s206 = sand.u32 %s112, 1
        %s207 = smul.addr %s206, 8
        %s208 = scalar_lea.vmem [#allocation5], %s207
        %s209 = smul.u32 2, %s25
        %v210 = vld [vmem:[%s185] sm:$0xff]
        %v211 = vld [vmem:[%s185 + $0x8] sm:$0xff]
        %v212 = vld [vmem:[%s1] sm:$0xff]
        %vm213 = vcmask 130048
        %v215 = vsel %vm213, %v212, 0
        %217 = vmatpush.msra.mxu0 0.0
        %218 = vmatpush.msra.mxu0 0.0
        %219 = vmatpush.msra.mxu0 0.0
        %220 = vmatpush.msra.mxu0 0.0
        %221 = vmatpush.msra.mxu0 0.0
        %222 = vmatpush.msra.mxu0 0.0
        %223 = vmatpush.msra.mxu0 0.0
        %224 = vmatpush.msra.mxu0 0.0
        %225 = vmatpush.msra.mxu0 0.0
        %226 = vmatpush.msra.mxu0 0.0
        %227 = vmatpush.msra.mxu0 0.0
        %228 = vmatpush.msra.mxu0 0.0
        %229 = vmatpush.msra.mxu0 0.0
        %230 = vmatpush.msra.mxu0 0.0
        %231 = vmatpush.msra.mxu0 %v211
        %232 = vmatpush.msra.mxu0 %v210
        %233 = vmatmul.f32.gmra.mxu0 %v215
        %v234 = vpop.f32.mrf.mxu0
        %v235 = vadd.f32 0.0, %v234
        %236 = vdwg.mxu0
        %v237 = vld [vmem:[%s2] sm:$0xff]
        %v238 = vld [vmem:[%s2 + $0x8] sm:$0xff]
        %v240 = vsel %vm213, %v235, 0
        %242 = vmatpush.msra.mxu0 0.0
        %243 = vmatpush.msra.mxu0 0.0
        %244 = vmatpush.msra.mxu0 0.0
        %245 = vmatpush.msra.mxu0 0.0
        %246 = vmatpush.msra.mxu0 0.0
        %247 = vmatpush.msra.mxu0 0.0
        %248 = vmatpush.msra.mxu0 0.0
        %249 = vmatpush.msra.mxu0 0.0
        %250 = vmatpush.msra.mxu0 0.0
        %251 = vmatpush.msra.mxu0 0.0
        %252 = vmatpush.msra.mxu0 0.0
        %253 = vmatpush.msra.mxu0 0.0
        %254 = vmatpush.msra.mxu0 0.0
        %255 = vmatpush.msra.mxu0 0.0
        %256 = vmatpush.msra.mxu0 %v238
        %257 = vmatpush.msra.mxu0 %v237
        %258 = vmatmul.f32.gmra.mxu0 %v240
        %v259 = vpop.f32.mrf.mxu0
        %v260 = vadd.f32 0.0, %v259
        %261 = vdwg.mxu0
        %v262 = vmul.f32 %v260, 0.25
        %vm263 = vcmask 64512
        %264 = vst.msk [vmem:[%s208] sm:$0xff] %vm263, %v262
        %s265 = sand.u32 %s112, 1
        %s266 = scalar_lea.sflag [#allocation4], %s265
        %s267 = sand.u32 %s112, 1
        %s268 = smul.addr %s267, 8
        %s269 = scalar_lea.vmem [#allocation5], %s268
        // Predicated region
        $region37: #{tpu_custom_call.1} parent=31 // pred_check
          %p270 = pneg %p122
        $region38: #{tpu_custom_call.1} parent=31 // pred_check_branch
          %272 = sbr.rel (%p270) target = $region40
        $region39: #{tpu_custom_call.1} parent=31 // pred_region
          %274 = vsyncadd %s266, 0
          %s275 = sadd.s32 %s25, %s24
          %s276 = smul.addr %s275, 8
          %s277 = scalar_lea.hbm %s3, %s276
          %s279 = sshll.u32 %s269, 4
          %s280 = int_to_ptr.vmem [resolvable:$true] %s279
          %s281 = sshll.u32 %s277, 4
          %s282 = int_to_ptr.hbm [resolvable:$true] %s281
          %284 = dma.vmem_to_hbm [thread:$0]  %s280, 128, %s282, %s266
        $region40: #{tpu_custom_call.1} parent=31 // pred_fallthru
          _
      $region32: #{tpu_custom_call.1} parent=5 // pred_fallthru
        _
      %p285 = scmp.le.s32.totalorder 2, %s15
      // Predicated region
      $region41: #{tpu_custom_call.1} parent=5 // pred_check
        %p286 = pneg %p285
      $region42: #{tpu_custom_call.1} parent=5 // pred_check_branch
        %288 = sbr.rel (%p286) target = $region44
      $region43: #{tpu_custom_call.1} parent=5 // pred_region
        %s289 = ssub.s32 %s15, 2
        // Predicated region
        $region45: #{tpu_custom_call.1} parent=43 // pred_check
          %p290 = pneg %p128
        $region46: #{tpu_custom_call.1} parent=43 // pred_check_branch
          %292 = sbr.rel (%p290) target = $region48
        $region47: #{tpu_custom_call.1} parent=43 // pred_region
          %s293 = sand.u32 %s113, 1
          %s294 = scalar_lea.sflag [#allocation4], %s293
          %s295 = sand.u32 %s113, 1
          %s296 = smul.addr %s295, 8
          %s297 = scalar_lea.vmem [#allocation5], %s296
          %299 = dma.done %s294, 128
        $region48: #{tpu_custom_call.1} parent=43 // pred_fallthru
          _
      $region44: #{tpu_custom_call.1} parent=5 // pred_fallthru
        _
    $region6: #{tpu_custom_call.1} parent=1 // loop_footer
      %s19 = sadd.s32 1, %s15
    $region7: #{tpu_custom_call.1} parent=1 // loop_footer_branch
      %14 = sbr.rel target = $region3
    $region8: #{tpu_custom_call.1} parent=1 // loop_exit
      _
    %300 = vsyncpa [#allocation3], 1
    %s301 = scalar_lea.sflag [#allocation3], 1
    %302 = vsyncpa %s301, 1
    %303 = vsyncpa [#allocation4], 1
    %s304 = scalar_lea.sflag [#allocation4], 1
    %305 = vsyncpa %s304, 1

</llo_original>
